<compile_context>
chip_gen: v6e
topology: v6e:2x2x1
jax: 0.10.0
libtpu: 0.0.40
codegen_flags: <defaults>
</compile_context>

<pallas_src>
import numpy as np
import jax
import jax.numpy as jnp
from jax import lax
from jax.experimental import pallas as pl
from jax.experimental.pallas import tpu as pltpu

# ------------------------- problem sizes (small, deterministic) --------------
N, C_IN, H, W = 2, 4, 16, 16          # input  NCHW = (2, 4, 16, 16)
C0, C1, C2 = 8, 8, 16                 # out_channels = (8, 8, 16)
STRIDE = 2
HO, WO = H // STRIDE, W // STRIDE     # 8 x 8
P = N * HO * WO                       # flattened output pixels = 128 (lane axis)
EPS = 1e-5
PADW = P + 2 * (WO + 1)               # zero-padded pixel axis for the 3x3 taps
NBN = C0 + C2 + C1 + C2               # 48 packed BN channels

_VMEM = pl.BlockSpec(memory_space=pltpu.MemorySpace.VMEM)


# ------------------- static halo masks (host-side, numpy) --------------------
def _build_halo_masks() -> np.ndarray:
    """(8, P) f32 validity masks for the 8 non-center 3x3 taps.  Purely a
    function of HO/WO/dh/dw and the (n, ho, wo) lane packing -> precomputed."""
    p_idx = np.arange(P)
    hh = (p_idx // WO) % HO            # output row of lane p
    ww = p_idx % WO                    # output col of lane p
    rows = []
    for kh in range(3):
        for kw in range(3):
            dh, dw = kh - 1, kw - 1
            if dh == 0 and dw == 0:
                continue
            valid = ((hh + dh >= 0) & (hh + dh < HO) &
                     (ww + dw >= 0) & (ww + dw < WO))
            rows.append(valid.astype(np.float32))
    return np.stack(rows, axis=0)


_HALO_MASKS = _build_halo_masks()      # compile-time constant, one (8, P) DMA


# ----------------------- BatchNorm (training mode), (C, P) tiles -------------
# TODO(synk): BatchNorm2d running_mean / running_var buffer updates (a
# training-mode side effect) are not materialized; only the forward output is.
def _bn_fold(y, gamma, beta):
    """Per-channel stats over the P (lane) axis, biased variance, single
    reduction pass, scale/shift folded so normalization is one FMA/element."""
    inv_n = 1.0 / y.shape[1]
    mean = jnp.sum(y, axis=1, keepdims=True) * inv_n             # (C, 1)
    msq = jnp.sum(y * y, axis=1, keepdims=True) * inv_n          # E[y^2]  (C, 1)
    var = msq - mean * mean                                      # biased variance
    scale = gamma * lax.rsqrt(var + EPS)                         # (C, 1)
    shift = beta - mean * scale                                  # (C, 1)
    return y * scale + shift


# ------------------------------- the kernel ----------------------------------
def _kernel(xs_ref, w1s_ref, w2_ref, w3_ref, gb_ref, mask_ref, out_ref, pad_ref):
    xs = xs_ref[...]                                             # (C_IN, P)
    gb = gb_ref[...]                                             # (48, 2) packed BN params
    gamma = gb[:, 0:1]                                           # (48, 1)
    beta = gb[:, 1:2]                                            # (48, 1)

    # --- conv1 (1x1/s2) + shortcut conv (1x1/s2): ONE fused MXU matmul, then
    #     ONE fused BN reduction pass over all C0+C2 channels.
    y = jnp.dot(w1s_ref[...], xs, preferred_element_type=jnp.float32)   # (C0+C2, P)
    y = _bn_fold(y, gamma[:C0 + C2], beta[:C0 + C2])
    y1 = jnp.maximum(y[:C0], 0.0)                                # conv1 branch -> relu1
    sc = y[C0:]                                                  # shortcut branch (no relu)

    # --- conv2 (3x3, stride 1, pad 1) as ONE K=9*C0 im2col matmul.
    #     The 9 shifted windows are unit-stride static slices of a zero-padded
    #     copy of y1 along the pixel (lane) axis (no rotate-direction probe);
    #     host-precomputed halo masks zero the row/image-crossing lanes.
    pad_ref[...] = jnp.zeros_like(pad_ref)                       # (C0, PADW)
    pad_ref[:, pl.ds(WO + 1, P)] = y1
    mask = mask_ref[...]                                         # (8, P)
    blocks = []
    t = 0
    for kh in range(3):
        for kw in range(3):
            off = (kh - 1) * WO + (kw - 1)                       # lane shift of this tap
            if off == 0:
                blocks.append(y1)                                # center tap, no mask
                continue
            tap = pad_ref[:, pl.ds(WO + 1 + off, P)]             # (C0, P), zero-filled edges
            blocks.append(tap * mask[t:t + 1, :])
            t += 1
    # Sublane-aligned concat (blocks of C0=8 rows): pure vreg stacking; keep the
    # single large-K MXU push rather than 9 K=8 matmuls.
    col = jnp.concatenate(blocks, axis=0)                        # (9*C0, P)
    y2 = jnp.dot(w2_ref[...], col, preferred_element_type=jnp.float32)  # (C1, P)
    y2 = jnp.maximum(
        _bn_fold(y2, gamma[C0 + C2:C0 + C2 + C1], beta[C0 + C2:C0 + C2 + C1]), 0.0)

    # --- conv3 (1x1) + bn3, residual add, final relu ---
    y3 = jnp.dot(w3_ref[...], y2, preferred_element_type=jnp.float32)   # (C2, P)
    y3 = _bn_fold(y3, gamma[C0 + C2 + C1:], beta[C0 + C2 + C1:])
    out_ref[...] = jnp.maximum(y3 + sc, 0.0)                     # (C2, 128): lane-dense store


# ------------------------------- wrapper --------------------------------------
@jax.jit
def conv_block(x_nchw, p):
    # Host-side layout glue on an 8 KiB tensor: the stride-2 subsample realizes
    # the two 1x1/s2 convs; channel-major (C, P) puts the 128 output pixels on
    # the lane axis so stores and BN reductions are lane-dense.
    # TODO(synk): at real ResNet sizes fold this gather/transpose (and the
    # output transpose) into the kernel's DMA (memory_space=pl.ANY + strided
    # copies), add a "parallel" batch/pixel grid axis for v7x's 2 TensorCores,
    # re-derive tiles for the 64 MiB v7x VMEM budget (set vmem_limit_bytes),
    # and cast MXU operands to bf16 with >=256-wide pixel tiles on v6e/v7x
    # (keep BN/ReLU math in f32).  At this toy size one grid-less launch wins.
    xs = x_nchw[:, :, ::STRIDE, ::STRIDE]                         # (N, C_IN, HO, WO)
    xs_cp = jnp.transpose(xs, (1, 0, 2, 3)).reshape(C_IN, P)      # (C_IN, P)

    # Weights, matmul-ready for the (Cout, Cin) x (Cin, P) layout; conv1 and the
    # shortcut share the same input, so their weights are stacked into one matmul.
    w1s = jnp.concatenate([p["w1"].T, p["ws"].T], axis=0)         # (C0+C2, C_IN)
    w2m = jnp.transpose(p["w2"], (3, 0, 1, 2)).reshape(C1, 9 * C0)  # (C1, 9*C0)
    w3m = p["w3"].T                                               # (C2, C1)

    # All 12 per-channel BN vectors packed into ONE (48, 2) slab -> 1 DMA.
    # Order [bn1 | bn_shortcut | bn2 | bn3] so the fused conv1+shortcut stage
    # reads a single contiguous (C0+C2) slice.
    gam = jnp.concatenate([p["g1"].reshape(-1), p["gs"].reshape(-1),
                           p["g2"].reshape(-1), p["g3"].reshape(-1)])
    bet = jnp.concatenate([p["be1"].reshape(-1), p["bes"].reshape(-1),
                           p["be2"].reshape(-1), p["be3"].reshape(-1)])
    gb = jnp.stack([gam, bet], axis=1)                            # (NBN, 2) = (48, 2)

    # conv biases b1/b2/b3/bs are intentionally NOT passed: a per-channel
    # constant added before training-mode BN is cancelled exactly by the mean
    # subtraction (the reference includes them; outputs agree to fp roundoff).
    out_cp = pl.pallas_call(
        _kernel,
        out_shape=jax.ShapeDtypeStruct((C2, P), jnp.float32),     # lane-dense (16, 128)
        in_specs=[_VMEM] * 6,
        out_specs=_VMEM,
        scratch_shapes=[pltpu.VMEM((C0, PADW), jnp.float32)],     # zero-padded y1
    )(xs_cp, w1s, w2m, w3m, gb, jnp.asarray(_HALO_MASKS))

    return jnp.transpose(out_cp.reshape(C2, N, HO, WO), (1, 0, 2, 3))   # NCHW


# ----------------------------- pure-JAX reference ------------------------------
def ref_forward(x_nchw, p):
    x = jnp.transpose(x_nchw, (0, 2, 3, 1))
    dn = ("NHWC", "HWIO", "NHWC")

    def conv(x, w_hwio, b, stride, pad):
        y = lax.conv_general_dilated(x, w_hwio, (stride, stride), pad,
                                     dimension_numbers=dn)
        return y + b.reshape(1, 1, 1, -1)

    def bn(y, g, be):
        m = jnp.mean(y, axis=(0, 1, 2), keepdims=True)
        v = jnp.mean((y - m) ** 2, axis=(0, 1, 2), keepdims=True)
        return (y - m) * lax.rsqrt(v + EPS) * g.reshape(1, 1, 1, -1) + be.reshape(1, 1, 1, -1)

    y = conv(x, p["w1"].reshape(1, 1, C_IN, C0), p["b1"], STRIDE, "VALID")
    y = jnp.maximum(bn(y, p["g1"], p["be1"]), 0.0)
    y = conv(y, p["w2"], p["b2"], 1, [(1, 1), (1, 1)])
    y = jnp.maximum(bn(y, p["g2"], p["be2"]), 0.0)
    y = conv(y, p["w3"].reshape(1, 1, C1, C2), p["b3"], 1, "VALID")
    y = bn(y, p["g3"], p["be3"])
    sc = conv(x, p["ws"].reshape(1, 1, C_IN, C2), p["bs"], STRIDE, "VALID")
    sc = bn(sc, p["gs"], p["bes"])
    return jnp.transpose(jnp.maximum(y + sc, 0.0), (0, 3, 1, 2))


# ----------------------------------- main --------------------------------------
if __name__ == "__main__":
    key = jax.random.PRNGKey(0)
    ks = jax.random.split(key, 17)

    def w(k, shape, fan_in):
        return jax.random.uniform(k, shape, jnp.float32, -1.0, 1.0) / (fan_in ** 0.5)

    params = {
        # conv weights stored matmul-friendly: 1x1 convs as (Cin, Cout), 3x3 as HWIO
        "w1": w(ks[0], (C_IN, C0), C_IN),        "b1": w(ks[1], (1, C0), C_IN),
        "w2": w(ks[2], (3, 3, C0, C1), 9 * C0),  "b2": w(ks[3], (1, C1), 9 * C0),
        "w3": w(ks[4], (C1, C2), C1),            "b3": w(ks[5], (1, C2), C1),
        "ws": w(ks[6], (C_IN, C2), C_IN),        "bs": w(ks[7], (1, C2), C_IN),
        # BatchNorm affine params (deterministic, near PyTorch default init)
        "g1": 1.0 + 0.1 * jax.random.normal(ks[8], (1, C0)),  "be1": 0.1 * jax.random.normal(ks[9], (1, C0)),
        "g2": 1.0 + 0.1 * jax.random.normal(ks[10], (1, C1)), "be2": 0.1 * jax.random.normal(ks[11], (1, C1)),
        "g3": 1.0 + 0.1 * jax.random.normal(ks[12], (1, C2)), "be3": 0.1 * jax.random.normal(ks[13], (1, C2)),
        "gs": 1.0 + 0.1 * jax.random.normal(ks[14], (1, C2)), "bes": 0.1 * jax.random.normal(ks[15], (1, C2)),
    }
    params = {k: v.astype(jnp.float32) for k, v in params.items()}

    x = jax.random.normal(ks[16], (N, C_IN, H, W), jnp.float32)

    out = jax.block_until_ready(conv_block(x, params))
    ref = jax.block_until_ready(ref_forward(x, params))

    assert out.shape == (N, C2, HO, WO), out.shape
    assert jnp.allclose(out, ref, rtol=1e-4, atol=1e-4), float(jnp.abs(out - ref).max())
    print("KERNEL_OK")
</pallas_src>

<mosaic_0001>
module attributes {stable_mosaic.version = 11 : i64} {
  func.func @_kernel(%arg0: memref<4x128xf32, #tpu.memory_space<vmem>>, %arg1: memref<24x4xf32, #tpu.memory_space<vmem>>, %arg2: memref<8x72xf32, #tpu.memory_space<vmem>>, %arg3: memref<16x8xf32, #tpu.memory_space<vmem>>, %arg4: memref<48x2xf32, #tpu.memory_space<vmem>>, %arg5: memref<8x128xf32, #tpu.memory_space<vmem>>, %arg6: memref<16x128xf32, #tpu.memory_space<vmem>>, %arg7: memref<8x146xf32, #tpu.memory_space<vmem>>) attributes {dimension_semantics = [], scalar_prefetch = 0 : i64, scratch_operands = 1 : i64, tpu.core_type = #tpu.core_type<tc>} {
    %c0 = arith.constant 0 : index
    %c0_0 = arith.constant 0 : index
    %0 = vector.load %arg0[%c0, %c0_0] : memref<4x128xf32, #tpu.memory_space<vmem>>, vector<4x128xf32>
    %c0_1 = arith.constant 0 : index
    %c0_2 = arith.constant 0 : index
    %1 = vector.load %arg4[%c0_1, %c0_2] : memref<48x2xf32, #tpu.memory_space<vmem>>, vector<48x2xf32>
    %2 = vector.extract_strided_slice %1 {offsets = [0, 0], sizes = [48, 1], strides = [1, 1]} : vector<48x2xf32> to vector<48x1xf32>
    %3 = vector.extract_strided_slice %1 {offsets = [0, 1], sizes = [48, 1], strides = [1, 1]} : vector<48x2xf32> to vector<48x1xf32>
    %c0_3 = arith.constant 0 : index
    %c0_4 = arith.constant 0 : index
    %4 = vector.load %arg1[%c0_3, %c0_4] : memref<24x4xf32, #tpu.memory_space<vmem>>, vector<24x4xf32>
    %cst = arith.constant dense<0.000000e+00> : vector<24x128xf32>
    %5 = tpu.matmul %4, %0, %cst {dimension_numbers = #tpu.dot_dimension_numbers<[1], [0], [0], [1], [0, 0, 1, 1], [], []>} : vector<24x4xf32>, vector<4x128xf32>, vector<24x128xf32> -> vector<24x128xf32>
    %6 = vector.extract_strided_slice %2 {offsets = [0, 0], sizes = [24, 1], strides = [1, 1]} : vector<48x1xf32> to vector<24x1xf32>
    %7 = vector.extract_strided_slice %3 {offsets = [0, 0], sizes = [24, 1], strides = [1, 1]} : vector<48x1xf32> to vector<24x1xf32>
    %cst_5 = arith.constant dense<0.000000e+00> : vector<24xf32>
    %8 = vector.multi_reduction <add>, %5, %cst_5 [1] : vector<24x128xf32> to vector<24xf32>
    %9 = vector.shape_cast %8 : vector<24xf32> to vector<24x1xf32>
    %cst_6 = arith.constant 7.812500e-03 : f32
    %10 = vector.broadcast %cst_6 : f32 to vector<24x1xf32>
    %11 = arith.mulf %9, %10 : vector<24x1xf32>
    %12 = arith.mulf %5, %5 : vector<24x128xf32>
    %cst_7 = arith.constant dense<0.000000e+00> : vector<24xf32>
    %13 = vector.multi_reduction <add>, %12, %cst_7 [1] : vector<24x128xf32> to vector<24xf32>
    %14 = vector.shape_cast %13 : vector<24xf32> to vector<24x1xf32>
    %cst_8 = arith.constant 7.812500e-03 : f32
    %15 = vector.broadcast %cst_8 : f32 to vector<24x1xf32>
    %16 = arith.mulf %14, %15 : vector<24x1xf32>
    %17 = arith.mulf %11, %11 : vector<24x1xf32>
    %18 = arith.subf %16, %17 : vector<24x1xf32>
    %cst_9 = arith.constant 9.99999974E-6 : f32
    %19 = vector.broadcast %cst_9 : f32 to vector<24x1xf32>
    %20 = arith.addf %18, %19 : vector<24x1xf32>
    %21 = math.rsqrt %20 : vector<24x1xf32>
    %22 = arith.mulf %6, %21 : vector<24x1xf32>
    %23 = arith.mulf %11, %22 : vector<24x1xf32>
    %24 = arith.subf %7, %23 : vector<24x1xf32>
    %25 = vector.broadcast %22 : vector<24x1xf32> to vector<24x128xf32>
    %26 = arith.mulf %5, %25 : vector<24x128xf32>
    %27 = vector.broadcast %24 : vector<24x1xf32> to vector<24x128xf32>
    %28 = arith.addf %26, %27 : vector<24x128xf32>
    %29 = vector.extract_strided_slice %28 {offsets = [0, 0], sizes = [8, 128], strides = [1, 1]} : vector<24x128xf32> to vector<8x128xf32>
    %cst_10 = arith.constant 0.000000e+00 : f32
    %30 = vector.broadcast %cst_10 : f32 to vector<8x128xf32>
    %31 = arith.maximumf %29, %30 : vector<8x128xf32>
    %32 = vector.extract_strided_slice %28 {offsets = [8, 0], sizes = [16, 128], strides = [1, 1]} : vector<24x128xf32> to vector<16x128xf32>
    %cst_11 = arith.constant 0.000000e+00 : f32
    %33 = vector.broadcast %cst_11 : f32 to vector<8x146xf32>
    %c0_12 = arith.constant 0 : index
    %c0_13 = arith.constant 0 : index
    %34 = vector.load %arg7[%c0_12, %c0_13] : memref<8x146xf32, #tpu.memory_space<vmem>>, vector<8x146xf32>
    tpu.vector_store %arg7[%c0_12, %c0_13], %33 {strides = array<i32>} : memref<8x146xf32, #tpu.memory_space<vmem>>, vector<8x146xf32>,
    %c0_14 = arith.constant 0 : index
    %c9 = arith.constant 9 : index
    %35 = vector.load %arg7[%c0_14, %c9] : memref<8x146xf32, #tpu.memory_space<vmem>>, vector<8x128xf32>
    tpu.vector_store %arg7[%c0_14, %c9], %31 {strides = array<i32>} : memref<8x146xf32, #tpu.memory_space<vmem>>, vector<8x128xf32>,
    %c0_15 = arith.constant 0 : index
    %c0_16 = arith.constant 0 : index
    %36 = vector.load %arg5[%c0_15, %c0_16] : memref<8x128xf32, #tpu.memory_space<vmem>>, vector<8x128xf32>
    %c0_17 = arith.constant 0 : index
    %c0_18 = arith.constant 0 : index
    %37 = vector.load %arg7[%c0_17, %c0_18] : memref<8x146xf32, #tpu.memory_space<vmem>>, vector<8x128xf32>
    %38 = vector.extract_strided_slice %36 {offsets = [0, 0], sizes = [1, 128], strides = [1, 1]} : vector<8x128xf32> to vector<1x128xf32>
    %39 = vector.broadcast %38 : vector<1x128xf32> to vector<8x128xf32>
    %40 = arith.mulf %37, %39 : vector<8x128xf32>
    %c0_19 = arith.constant 0 : index
    %c1 = arith.constant 1 : index
    %41 = vector.load %arg7[%c0_19, %c1] : memref<8x146xf32, #tpu.memory_space<vmem>>, vector<8x128xf32>
    %42 = vector.extract_strided_slice %36 {offsets = [1, 0], sizes = [1, 128], strides = [1, 1]} : vector<8x128xf32> to vector<1x128xf32>
    %43 = vector.broadcast %42 : vector<1x128xf32> to vector<8x128xf32>
    %44 = arith.mulf %41, %43 : vector<8x128xf32>
    %c0_20 = arith.constant 0 : index
    %c2 = arith.constant 2 : index
    %45 = vector.load %arg7[%c0_20, %c2] : memref<8x146xf32, #tpu.memory_space<vmem>>, vector<8x128xf32>
    %46 = vector.extract_strided_slice %36 {offsets = [2, 0], sizes = [1, 128], strides = [1, 1]} : vector<8x128xf32> to vector<1x128xf32>
    %47 = vector.broadcast %46 : vector<1x128xf32> to vector<8x128xf32>
    %48 = arith.mulf %45, %47 : vector<8x128xf32>
    %c0_21 = arith.constant 0 : index
    %c8 = arith.constant 8 : index
    %49 = vector.load %arg7[%c0_21, %c8] : memref<8x146xf32, #tpu.memory_space<vmem>>, vector<8x128xf32>
    %50 = vector.extract_strided_slice %36 {offsets = [3, 0], sizes = [1, 128], strides = [1, 1]} : vector<8x128xf32> to vector<1x128xf32>
    %51 = vector.broadcast %50 : vector<1x128xf32> to vector<8x128xf32>
    %52 = arith.mulf %49, %51 : vector<8x128xf32>
    %c0_22 = arith.constant 0 : index
    %c10 = arith.constant 10 : index
    %53 = vector.load %arg7[%c0_22, %c10] : memref<8x146xf32, #tpu.memory_space<vmem>>, vector<8x128xf32>
    %54 = vector.extract_strided_slice %36 {offsets = [4, 0], sizes = [1, 128], strides = [1, 1]} : vector<8x128xf32> to vector<1x128xf32>
    %55 = vector.broadcast %54 : vector<1x128xf32> to vector<8x128xf32>
    %56 = arith.mulf %53, %55 : vector<8x128xf32>
    %c0_23 = arith.constant 0 : index
    %c16 = arith.constant 16 : index
    %57 = vector.load %arg7[%c0_23, %c16] : memref<8x146xf32, #tpu.memory_space<vmem>>, vector<8x128xf32>
    %58 = vector.extract_strided_slice %36 {offsets = [5, 0], sizes = [1, 128], strides = [1, 1]} : vector<8x128xf32> to vector<1x128xf32>
    %59 = vector.broadcast %58 : vector<1x128xf32> to vector<8x128xf32>
    %60 = arith.mulf %57, %59 : vector<8x128xf32>
    %c0_24 = arith.constant 0 : index
    %c17 = arith.constant 17 : index
    %61 = vector.load %arg7[%c0_24, %c17] : memref<8x146xf32, #tpu.memory_space<vmem>>, vector<8x128xf32>
    %62 = vector.extract_strided_slice %36 {offsets = [6, 0], sizes = [1, 128], strides = [1, 1]} : vector<8x128xf32> to vector<1x128xf32>
    %63 = vector.broadcast %62 : vector<1x128xf32> to vector<8x128xf32>
    %64 = arith.mulf %61, %63 : vector<8x128xf32>
    %c0_25 = arith.constant 0 : index
    %c18 = arith.constant 18 : index
    %65 = vector.load %arg7[%c0_25, %c18] : memref<8x146xf32, #tpu.memory_space<vmem>>, vector<8x128xf32>
    %66 = vector.extract_strided_slice %36 {offsets = [7, 0], sizes = [1, 128], strides = [1, 1]} : vector<8x128xf32> to vector<1x128xf32>
    %67 = vector.broadcast %66 : vector<1x128xf32> to vector<8x128xf32>
    %68 = arith.mulf %65, %67 : vector<8x128xf32>
    %69 = tpu.concatenate %40, %44, %48, %52, %31, %56, %60, %64, %68 in 0 : vector<8x128xf32>, vector<8x128xf32>, vector<8x128xf32>, vector<8x128xf32>, vector<8x128xf32>, vector<8x128xf32>, vector<8x128xf32>, vector<8x128xf32>, vector<8x128xf32> -> vector<72x128xf32>
    %c0_26 = arith.constant 0 : index
    %c0_27 = arith.constant 0 : index
    %70 = vector.load %arg2[%c0_26, %c0_27] : memref<8x72xf32, #tpu.memory_space<vmem>>, vector<8x72xf32>
    %cst_28 = arith.constant dense<0.000000e+00> : vector<8x128xf32>
    %71 = tpu.matmul %70, %69, %cst_28 {dimension_numbers = #tpu.dot_dimension_numbers<[1], [0], [0], [1], [0, 0, 1, 1], [], []>} : vector<8x72xf32>, vector<72x128xf32>, vector<8x128xf32> -> vector<8x128xf32>
    %72 = vector.extract_strided_slice %2 {offsets = [24, 0], sizes = [8, 1], strides = [1, 1]} : vector<48x1xf32> to vector<8x1xf32>
    %73 = vector.extract_strided_slice %3 {offsets = [24, 0], sizes = [8, 1], strides = [1, 1]} : vector<48x1xf32> to vector<8x1xf32>
    %cst_29 = arith.constant dense<0.000000e+00> : vector<8xf32>
    %74 = vector.multi_reduction <add>, %71, %cst_29 [1] : vector<8x128xf32> to vector<8xf32>
    %75 = vector.shape_cast %74 : vector<8xf32> to vector<8x1xf32>
    %cst_30 = arith.constant 7.812500e-03 : f32
    %76 = vector.broadcast %cst_30 : f32 to vector<8x1xf32>
    %77 = arith.mulf %75, %76 : vector<8x1xf32>
    %78 = arith.mulf %71, %71 : vector<8x128xf32>
    %cst_31 = arith.constant dense<0.000000e+00> : vector<8xf32>
    %79 = vector.multi_reduction <add>, %78, %cst_31 [1] : vector<8x128xf32> to vector<8xf32>
    %80 = vector.shape_cast %79 : vector<8xf32> to vector<8x1xf32>
    %cst_32 = arith.constant 7.812500e-03 : f32
    %81 = vector.broadcast %cst_32 : f32 to vector<8x1xf32>
    %82 = arith.mulf %80, %81 : vector<8x1xf32>
    %83 = arith.mulf %77, %77 : vector<8x1xf32>
    %84 = arith.subf %82, %83 : vector<8x1xf32>
    %cst_33 = arith.constant 9.99999974E-6 : f32
    %85 = vector.broadcast %cst_33 : f32 to vector<8x1xf32>
    %86 = arith.addf %84, %85 : vector<8x1xf32>
    %87 = math.rsqrt %86 : vector<8x1xf32>
    %88 = arith.mulf %72, %87 : vector<8x1xf32>
    %89 = arith.mulf %77, %88 : vector<8x1xf32>
    %90 = arith.subf %73, %89 : vector<8x1xf32>
    %91 = vector.broadcast %88 : vector<8x1xf32> to vector<8x128xf32>
    %92 = arith.mulf %71, %91 : vector<8x128xf32>
    %93 = vector.broadcast %90 : vector<8x1xf32> to vector<8x128xf32>
    %94 = arith.addf %92, %93 : vector<8x128xf32>
    %cst_34 = arith.constant 0.000000e+00 : f32
    %95 = vector.broadcast %cst_34 : f32 to vector<8x128xf32>
    %96 = arith.maximumf %94, %95 : vector<8x128xf32>
    %c0_35 = arith.constant 0 : index
    %c0_36 = arith.constant 0 : index
    %97 = vector.load %arg3[%c0_35, %c0_36] : memref<16x8xf32, #tpu.memory_space<vmem>>, vector<16x8xf32>
    %cst_37 = arith.constant dense<0.000000e+00> : vector<16x128xf32>
    %98 = tpu.matmul %97, %96, %cst_37 {dimension_numbers = #tpu.dot_dimension_numbers<[1], [0], [0], [1], [0, 0, 1, 1], [], []>} : vector<16x8xf32>, vector<8x128xf32>, vector<16x128xf32> -> vector<16x128xf32>
    %99 = vector.extract_strided_slice %2 {offsets = [32, 0], sizes = [16, 1], strides = [1, 1]} : vector<48x1xf32> to vector<16x1xf32>
    %100 = vector.extract_strided_slice %3 {offsets = [32, 0], sizes = [16, 1], strides = [1, 1]} : vector<48x1xf32> to vector<16x1xf32>
    %cst_38 = arith.constant dense<0.000000e+00> : vector<16xf32>
    %101 = vector.multi_reduction <add>, %98, %cst_38 [1] : vector<16x128xf32> to vector<16xf32>
    %102 = vector.shape_cast %101 : vector<16xf32> to vector<16x1xf32>
    %cst_39 = arith.constant 7.812500e-03 : f32
    %103 = vector.broadcast %cst_39 : f32 to vector<16x1xf32>
    %104 = arith.mulf %102, %103 : vector<16x1xf32>
    %105 = arith.mulf %98, %98 : vector<16x128xf32>
    %cst_40 = arith.constant dense<0.000000e+00> : vector<16xf32>
    %106 = vector.multi_reduction <add>, %105, %cst_40 [1] : vector<16x128xf32> to vector<16xf32>
    %107 = vector.shape_cast %106 : vector<16xf32> to vector<16x1xf32>
    %cst_41 = arith.constant 7.812500e-03 : f32
    %108 = vector.broadcast %cst_41 : f32 to vector<16x1xf32>
    %109 = arith.mulf %107, %108 : vector<16x1xf32>
    %110 = arith.mulf %104, %104 : vector<16x1xf32>
    %111 = arith.subf %109, %110 : vector<16x1xf32>
    %cst_42 = arith.constant 9.99999974E-6 : f32
    %112 = vector.broadcast %cst_42 : f32 to vector<16x1xf32>
    %113 = arith.addf %111, %112 : vector<16x1xf32>
    %114 = math.rsqrt %113 : vector<16x1xf32>
    %115 = arith.mulf %99, %114 : vector<16x1xf32>
    %116 = arith.mulf %104, %115 : vector<16x1xf32>
    %117 = arith.subf %100, %116 : vector<16x1xf32>
    %118 = vector.broadcast %115 : vector<16x1xf32> to vector<16x128xf32>
    %119 = arith.mulf %98, %118 : vector<16x128xf32>
    %120 = vector.broadcast %117 : vector<16x1xf32> to vector<16x128xf32>
    %121 = arith.addf %119, %120 : vector<16x128xf32>
    %122 = arith.addf %121, %32 : vector<16x128xf32>
    %cst_43 = arith.constant 0.000000e+00 : f32
    %123 = vector.broadcast %cst_43 : f32 to vector<16x128xf32>
    %124 = arith.maximumf %122, %123 : vector<16x128xf32>
    %c0_44 = arith.constant 0 : index
    %c0_45 = arith.constant 0 : index
    %125 = vector.load %arg6[%c0_44, %c0_45] : memref<16x128xf32, #tpu.memory_space<vmem>>, vector<16x128xf32>
    tpu.vector_store %arg6[%c0_44, %c0_45], %124 {strides = array<i32>} : memref<16x128xf32, #tpu.memory_space<vmem>>, vector<16x128xf32>,
    return
  }
}

</mosaic_0001>

<llo_original>
// kernel: conv_block.1
$region0: #{conv_block.1}
  #allocation0 [shape = 'u32[]', space=smem, size = 0x4, offset = 0x4, fixed_abs, tag = 'smem constant byte address 0x4 - core index']
  #allocation1 [shape = 'u32[144,128]{1,0:T(1,128)}', space=vmem, size = 0x12000, scoped, tag = 'internal scratch']
  #allocation2 [shape = 'f32[8,146]{1,0:T(8,128)}', space=vmem, size = 0x2000, scoped, tag = 'scratch operand']
  %s0 = inlined_call_operand.vmem [shape: f32[4,128], index: 0, kind: input, shape index: {}]
  %s1 = inlined_call_operand.vmem [shape: f32[24,4], index: 1, kind: input, shape index: {}]
  %s2 = inlined_call_operand.vmem [shape: f32[8,72], index: 2, kind: input, shape index: {}]
  %s3 = inlined_call_operand.vmem [shape: f32[16,8], index: 3, kind: input, shape index: {}]
  %s4 = inlined_call_operand.vmem [shape: f32[48,2], index: 4, kind: input, shape index: {}]
  %s5 = inlined_call_operand.vmem [shape: f32[8,128], index: 5, kind: input, shape index: {}]
  %s6 = inlined_call_operand.vmem [shape: f32[16,128], index: 6, kind: output, shape index: {}]
  %s7 = sld [smem:[#allocation0]]
  $region34: #{conv_block.1} parent=0
    _
  %s9 = ssub.s32 1, %s7
  %s10 = scalar_select 0, %s9, %s7
  // Predicated region
  $region2: #{conv_block.1} parent=0 // pred_check
    _
  $region3: #{conv_block.1} parent=0 // pred_check_branch
    %12 = sbr.rel (0) target = $region5
  $region4: #{conv_block.1} parent=0 // pred_region
    _
  $region5: #{conv_block.1} parent=0 // pred_fallthru
    _
  // Predicated region
  $region6: #{conv_block.1} parent=0 // pred_check
    _
  $region7: #{conv_block.1} parent=0 // pred_check_branch
    %14 = sbr.rel (0) target = $region9
  $region8: #{conv_block.1} parent=0 // pred_region
    _
  $region9: #{conv_block.1} parent=0 // pred_fallthru
    _
  // Predicated region
  $region10: #{conv_block.1} parent=0 // pred_check
    _
  $region11: #{conv_block.1} parent=0 // pred_check_branch
    %16 = sbr.rel (0) target = $region13
  $region12: #{conv_block.1} parent=0 // pred_region
    _
  $region13: #{conv_block.1} parent=0 // pred_fallthru
    _
  // Predicated region
  $region14: #{conv_block.1} parent=0 // pred_check
    _
  $region15: #{conv_block.1} parent=0 // pred_check_branch
    %18 = sbr.rel (0) target = $region17
  $region16: #{conv_block.1} parent=0 // pred_region
    _
  $region17: #{conv_block.1} parent=0 // pred_fallthru
    _
  // Predicated region
  $region18: #{conv_block.1} parent=0 // pred_check
    _
  $region19: #{conv_block.1} parent=0 // pred_check_branch
    %20 = sbr.rel (0) target = $region21
  $region20: #{conv_block.1} parent=0 // pred_region
    _
  $region21: #{conv_block.1} parent=0 // pred_fallthru
    _
  // Predicated region
  $region22: #{conv_block.1} parent=0 // pred_check
    _
  $region23: #{conv_block.1} parent=0 // pred_check_branch
    %22 = sbr.rel (0) target = $region25
  $region24: #{conv_block.1} parent=0 // pred_region
    _
  $region25: #{conv_block.1} parent=0 // pred_fallthru
    _
  %v23 = vld [vmem:[%s0] sm:$0xf]
  %v24 = vld [vmem:[%s4] sm:$0xff]
  %v25 = vld [vmem:[%s4 + $0x8] sm:$0xff]
  %v26 = vld [vmem:[%s4 + $0x10] sm:$0xff]
  %v27 = vld [vmem:[%s4 + $0x18] sm:$0xff]
  %v28 = vld [vmem:[%s4 + $0x20] sm:$0xff]
  %v29 = vld [vmem:[%s4 + $0x28] sm:$0xff]
  %v30 = vld [vmem:[%s1] sm:$0xff]
  %v31 = vld [vmem:[%s1 + $0x8] sm:$0xff]
  %v32 = vld [vmem:[%s1 + $0x10] sm:$0xff]
  %vm33 = vcmask 31744
  %v35 = vsel %vm33, %v30, 0
  %v38 = vsel %vm33, %v31, 0
  %v41 = vsel %vm33, %v32, 0
  %vm43 = vcmask 1043456
  %v45 = vsel %vm43, %v23, 0
  %47 = vmatprep.subr.mxu0 0.0
  %48 = vmatpush1.msra.mxu0 0.0
  %49 = vmatprep.subr.mxu0 0.0
  %50 = vmatpush1.msra.mxu0 0.0
  %51 = vmatprep.subr.mxu0 0.0
  %52 = vmatpush1.msra.mxu0 0.0
  %53 = vmatprep.subr.mxu0 0.0
  %54 = vmatpush1.msra.mxu0 0.0
  %55 = vmatprep.subr.mxu0 0.0
  %56 = vmatpush1.msra.mxu0 0.0
  %57 = vmatprep.subr.mxu0 0.0
  %58 = vmatpush1.msra.mxu0 0.0
  %59 = vmatprep.subr.mxu0 0.0
  %60 = vmatpush1.msra.mxu0 0.0
  %61 = vmatprep.subr.mxu0 0.0
  %62 = vmatpush1.msra.mxu0 0.0
  %63 = vmatprep.subr.mxu0 0.0
  %64 = vmatpush1.msra.mxu0 0.0
  %65 = vmatprep.subr.mxu0 0.0
  %66 = vmatpush1.msra.mxu0 0.0
  %67 = vmatprep.subr.mxu0 0.0
  %68 = vmatpush1.msra.mxu0 0.0
  %69 = vmatprep.subr.mxu0 0.0
  %70 = vmatpush1.msra.mxu0 0.0
  %71 = vmatprep.subr.mxu0 0.0
  %72 = vmatpush1.msra.mxu0 0.0
  %73 = vmatprep.subr.mxu0 0.0
  %74 = vmatpush1.msra.mxu0 0.0
  %75 = vmatprep.subr.mxu0 0.0
  %76 = vmatpush1.msra.mxu0 0.0
  %77 = vmatprep.subr.mxu0 0.0
  %78 = vmatpush1.msra.mxu0 %v45
  %79 = vmatprep.subr.mxu0 0.0
  %80 = vmatpush2.msra.mxu0 0.0
  %81 = vmatprep.subr.mxu0 0.0
  %82 = vmatpush2.msra.mxu0 0.0
  %83 = vmatprep.subr.mxu0 0.0
  %84 = vmatpush2.msra.mxu0 0.0
  %85 = vmatprep.subr.mxu0 0.0
  %86 = vmatpush2.msra.mxu0 0.0
  %87 = vmatprep.subr.mxu0 0.0
  %88 = vmatpush2.msra.mxu0 0.0
  %89 = vmatprep.subr.mxu0 0.0
  %90 = vmatpush2.msra.mxu0 0.0
  %91 = vmatprep.subr.mxu0 0.0
  %92 = vmatpush2.msra.mxu0 0.0
  %93 = vmatprep.subr.mxu0 0.0
  %94 = vmatpush2.msra.mxu0 0.0
  %95 = vmatprep.subr.mxu0 0.0
  %96 = vmatpush2.msra.mxu0 0.0
  %97 = vmatprep.subr.mxu0 0.0
  %98 = vmatpush2.msra.mxu0 0.0
  %99 = vmatprep.subr.mxu0 0.0
  %100 = vmatpush2.msra.mxu0 0.0
  %101 = vmatprep.subr.mxu0 0.0
  %102 = vmatpush2.msra.mxu0 0.0
  %103 = vmatprep.subr.mxu0 0.0
  %104 = vmatpush2.msra.mxu0 0.0
  %105 = vmatprep.subr.mxu0 0.0
  %106 = vmatpush2.msra.mxu0 0.0
  %107 = vmatprep.subr.mxu0 0.0
  %108 = vmatpush2.msra.mxu0 0.0
  %109 = vmatprep.subr.mxu0 0.0
  %110 = vmatpush2.msra.mxu0 0.0
  %111 = vmatprep.mubr.f32.mxu0 0.0
  %112 = vmatmul.mubr.f32.gmra.mxu0 %v35
  %v113 = vpop.f32.mrf.mxu0
  %v114 = vadd.f32 0.0, %v113
  %v115 = vpop.f32.mrf.mxu0
  %116 = vmatprep.mubr.f32.mxu0 0.0
  %117 = vmatmul.mubr.f32.gmra.mxu0 %v38
  %v118 = vpop.f32.mrf.mxu0
  %v119 = vadd.f32 0.0, %v118
  %v120 = vpop.f32.mrf.mxu0
  %121 = vmatprep.mubr.f32.mxu0 0.0
  %122 = vmatmul.mubr.f32.gmra.mxu0 %v41
  %v123 = vpop.f32.mrf.mxu0
  %v124 = vadd.f32 0.0, %v123
  %v125 = vpop.f32.mrf.mxu0
  %126 = vdwg.mxu0
  %127 = vadd.xlane.f32.xlu0 %v114
  %v128 = vpop.xlane.xlu0 %127
  %129 = vadd.xlane.f32.xlu0 %v119
  %v130 = vpop.xlane.xlu0 %129
  %131 = vadd.xlane.f32.xlu0 %v124
  %v132 = vpop.xlane.xlu0 %131
  %v133 = vmul.f32 %v128, 0.0078125
  %v134 = vmul.f32 %v130, 0.0078125
  %v135 = vmul.f32 %v132, 0.0078125
  %v136 = vmul.f32 %v114, %v114
  %v137 = vmul.f32 %v119, %v119
  %v138 = vmul.f32 %v124, %v124
  %139 = vadd.xlane.f32.xlu0 %v136
  %v140 = vpop.xlane.xlu0 %139
  %141 = vadd.xlane.f32.xlu0 %v137
  %v142 = vpop.xlane.xlu0 %141
  %143 = vadd.xlane.f32.xlu0 %v138
  %v144 = vpop.xlane.xlu0 %143
  %v145 = vmul.f32 %v140, 0.0078125
  %v146 = vmul.f32 %v142, 0.0078125
  %v147 = vmul.f32 %v144, 0.0078125
  %v148 = vmul.f32 %v133, %v133
  %v149 = vmul.f32 %v134, %v134
  %v150 = vmul.f32 %v135, %v135
  %v151 = vsub.f32 %v145, %v148
  %v152 = vsub.f32 %v146, %v149
  %v153 = vsub.f32 %v147, %v150
  %v154 = vadd.f32 %v151, 1e-05
  %v155 = vadd.f32 %v152, 1e-05
  %v156 = vadd.f32 %v153, 1e-05
  %v157 = vrsqrt.pop %v154
  %v158 = vrsqrt.pop %v155
  %v159 = vrsqrt.pop %v156
  %v160 = vmul.f32 %v24, %v157
  %v161 = vmul.f32 %v25, %v158
  %v162 = vmul.f32 %v26, %v159
  %v163 = vmul.f32 %v133, %v160
  %v164 = vmul.f32 %v134, %v161
  %v165 = vmul.f32 %v135, %v162
  %169 = vrot.lane.b32.xlu0 %v163, 1
  %v170 = vpop.permute.xlu0 %169
  %171 = vrot.lane.b32.xlu0 %v164, 1
  %v172 = vpop.permute.xlu0 %171
  %173 = vrot.lane.b32.xlu0 %v165, 1
  %v174 = vpop.permute.xlu0 %173
  %v178 = vsub.f32 %v24, %v170
  %v179 = vsub.f32 %v25, %v172
  %v180 = vsub.f32 %v26, %v174
  %182 = vset.pattern.permute.xlu0 0
  %183 = vperm.xlu0 %182, %v160
  %v184 = vpop.permute.xlu0 %183
  %187 = vset.pattern.permute.xlu0 0
  %188 = vperm.xlu0 %187, %v161
  %v189 = vpop.permute.xlu0 %188
  %192 = vset.pattern.permute.xlu0 0
  %193 = vperm.xlu0 %192, %v162
  %v194 = vpop.permute.xlu0 %193
  %v196 = vmul.f32 %v114, %v184
  %v197 = vmul.f32 %v119, %v189
  %v198 = vmul.f32 %v124, %v194
  %200 = vset.pattern.permute.xlu0 1
  %201 = vperm.xlu0 %200, %v178
  %v202 = vpop.permute.xlu0 %201
  %205 = vset.pattern.permute.xlu0 1
  %206 = vperm.xlu0 %205, %v179
  %v207 = vpop.permute.xlu0 %206
  %210 = vset.pattern.permute.xlu0 1
  %211 = vperm.xlu0 %210, %v180
  %v212 = vpop.permute.xlu0 %211
  %v214 = vadd.f32 %v196, %v202
  %v215 = vadd.f32 %v197, %v207
  %v216 = vadd.f32 %v198, %v212
  %v217 = vmax.f32 %v214, 0.0
  %218 = vst [vmem:[#allocation2] sm:$0xff] 0.0
  %vm219 = vcmask 146432
  %220 = vst.msk [vmem:[#allocation2 + $0x8] sm:$0xff] %vm219, 0.0
  %222 = vrot.lane.b32.xlu0 %v217, 9
  %v223 = vpop.permute.xlu0 %222
  %vm225 = vcmask 1047624
  %226 = vst.msk [vmem:[#allocation2] sm:$0xff] %vm225, %v223
  %vm227 = vcmask 72704
  %228 = vst.msk [vmem:[#allocation2 + $0x8] sm:$0xff] %vm227, %v223
  %v229 = vld [vmem:[%s5] sm:$0xff]
  %v230 = vld [vmem:[#allocation2] sm:$0xff]
  %v231 = vlaneseq
  %v232 = vshrl.u32 %v231, 7
  %v233 = vsub.s32 0, %v232
  %v234 = vrot.slane %v229, %v233
  %v235 = vmul.f32 %v230, %v234
  %v236 = vld [vmem:[#allocation2 + $0x8] sm:$0xff]
  %v237 = vlaneseq
  %v238 = vshrl.u32 %v237, 7
  %v239 = vsub.s32 1, %v238
  %v240 = vrot.slane %v229, %v239
  %242 = vrot.lane.b32.xlu0 %v240, 1
  %v243 = vpop.permute.xlu0 %242
  %v245 = vmul.f32 %v230, %v243
  %v246 = vmul.f32 %v236, %v243
  %v247 = vlaneseq
  %v248 = vshrl.u32 %v247, 7
  %v249 = vsub.s32 2, %v248
  %v250 = vrot.slane %v229, %v249
  %252 = vrot.lane.b32.xlu0 %v250, 2
  %v253 = vpop.permute.xlu0 %252
  %v255 = vmul.f32 %v230, %v253
  %v256 = vmul.f32 %v236, %v253
  %v257 = vlaneseq
  %v258 = vshrl.u32 %v257, 7
  %v259 = vsub.s32 3, %v258
  %v260 = vrot.slane %v229, %v259
  %262 = vrot.lane.b32.xlu0 %v260, 8
  %v263 = vpop.permute.xlu0 %262
  %v265 = vmul.f32 %v230, %v263
  %v266 = vmul.f32 %v236, %v263
  %v267 = vlaneseq
  %v268 = vshrl.u32 %v267, 7
  %v269 = vsub.s32 4, %v268
  %v270 = vrot.slane %v229, %v269
  %272 = vrot.lane.b32.xlu0 %v270, 10
  %v273 = vpop.permute.xlu0 %272
  %v275 = vmul.f32 %v230, %v273
  %v276 = vmul.f32 %v236, %v273
  %v277 = vlaneseq
  %v278 = vshrl.u32 %v277, 7
  %v279 = vsub.s32 5, %v278
  %v280 = vrot.slane %v229, %v279
  %282 = vrot.lane.b32.xlu0 %v280, 16
  %v283 = vpop.permute.xlu0 %282
  %v285 = vmul.f32 %v230, %v283
  %v286 = vmul.f32 %v236, %v283
  %v287 = vlaneseq
  %v288 = vshrl.u32 %v287, 7
  %v289 = vsub.s32 6, %v288
  %v290 = vrot.slane %v229, %v289
  %292 = vrot.lane.b32.xlu0 %v290, 17
  %v293 = vpop.permute.xlu0 %292
  %v295 = vmul.f32 %v230, %v293
  %v296 = vmul.f32 %v236, %v293
  %v297 = vlaneseq
  %v298 = vshrl.u32 %v297, 7
  %v299 = vsub.s32 7, %v298
  %v300 = vrot.slane %v229, %v299
  %302 = vrot.lane.b32.xlu0 %v300, 18
  %v303 = vpop.permute.xlu0 %302
  %v305 = vmul.f32 %v230, %v303
  %v306 = vmul.f32 %v236, %v303
  %309 = vrot.lane.b32.xlu0 %v245, 127
  %v310 = vpop.permute.xlu0 %309
  %311 = vrot.lane.b32.xlu0 %v246, 127
  %v312 = vpop.permute.xlu0 %311
  %vm313 = vcmask 1039360
  %v314 = vsel %vm313, %v310, %v312
  %318 = vrot.lane.b32.xlu0 %v255, 126
  %v319 = vpop.permute.xlu0 %318
  %320 = vrot.lane.b32.xlu0 %v256, 126
  %v321 = vpop.permute.xlu0 %320
  %vm322 = vcmask 1031168
  %v323 = vsel %vm322, %v319, %v321
  %327 = vrot.lane.b32.xlu0 %v265, 120
  %v328 = vpop.permute.xlu0 %327
  %329 = vrot.lane.b32.xlu0 %v266, 120
  %v330 = vpop.permute.xlu0 %329
  %vm331 = vcmask 982016
  %v332 = vsel %vm331, %v328, %v330
  %336 = vrot.lane.b32.xlu0 %v275, 118
  %v337 = vpop.permute.xlu0 %336
  %338 = vrot.lane.b32.xlu0 %v276, 118
  %v339 = vpop.permute.xlu0 %338
  %vm340 = vcmask 965632
  %v341 = vsel %vm340, %v337, %v339
  %345 = vrot.lane.b32.xlu0 %v285, 112
  %v346 = vpop.permute.xlu0 %345
  %347 = vrot.lane.b32.xlu0 %v286, 112
  %v348 = vpop.permute.xlu0 %347
  %vm349 = vcmask 916480
  %v350 = vsel %vm349, %v346, %v348
  %354 = vrot.lane.b32.xlu0 %v295, 111
  %v355 = vpop.permute.xlu0 %354
  %356 = vrot.lane.b32.xlu0 %v296, 111
  %v357 = vpop.permute.xlu0 %356
  %vm358 = vcmask 908288
  %v359 = vsel %vm358, %v355, %v357
  %363 = vrot.lane.b32.xlu0 %v305, 110
  %v364 = vpop.permute.xlu0 %363
  %365 = vrot.lane.b32.xlu0 %v306, 110
  %v366 = vpop.permute.xlu0 %365
  %vm367 = vcmask 900096
  %v368 = vsel %vm367, %v364, %v366
  %v370 = vld [vmem:[%s2] sm:$0xff]
  %vm371 = vcmask 588800
  %v373 = vsel %vm371, %v370, 0
  %375 = vmatprep.subr.mxu0 0.0
  %376 = vmatpush1.msra.mxu0 0.0
  %377 = vmatprep.subr.mxu0 0.0
  %378 = vmatpush1.msra.mxu0 0.0
  %379 = vmatprep.subr.mxu0 0.0
  %380 = vmatpush1.msra.mxu0 0.0
  %381 = vmatprep.subr.mxu0 0.0
  %382 = vmatpush1.msra.mxu0 0.0
  %383 = vmatprep.subr.mxu0 0.0
  %384 = vmatpush1.msra.mxu0 0.0
  %385 = vmatprep.subr.mxu0 0.0
  %386 = vmatpush1.msra.mxu0 0.0
  %387 = vmatprep.subr.mxu0 0.0
  %388 = vmatpush1.msra.mxu0 0.0
  %389 = vmatprep.subr.mxu0 0.0
  %390 = vmatpush1.msra.mxu0 %v368
  %391 = vmatprep.subr.mxu0 0.0
  %392 = vmatpush1.msra.mxu0 %v359
  %393 = vmatprep.subr.mxu0 0.0
  %394 = vmatpush1.msra.mxu0 %v350
  %395 = vmatprep.subr.mxu0 0.0
  %396 = vmatpush1.msra.mxu0 %v341
  %397 = vmatprep.subr.mxu0 0.0
  %398 = vmatpush1.msra.mxu0 %v217
  %399 = vmatprep.subr.mxu0 0.0
  %400 = vmatpush1.msra.mxu0 %v332
  %401 = vmatprep.subr.mxu0 0.0
  %402 = vmatpush1.msra.mxu0 %v323
  %403 = vmatprep.subr.mxu0 0.0
  %404 = vmatpush1.msra.mxu0 %v314
  %405 = vmatprep.subr.mxu0 0.0
  %406 = vmatpush1.msra.mxu0 %v235
  %407 = vmatprep.subr.mxu0 0.0
  %408 = vmatpush2.msra.mxu0 0.0
  %409 = vmatprep.subr.mxu0 0.0
  %410 = vmatpush2.msra.mxu0 0.0
  %411 = vmatprep.subr.mxu0 0.0
  %412 = vmatpush2.msra.mxu0 0.0
  %413 = vmatprep.subr.mxu0 0.0
  %414 = vmatpush2.msra.mxu0 0.0
  %415 = vmatprep.subr.mxu0 0.0
  %416 = vmatpush2.msra.mxu0 0.0
  %417 = vmatprep.subr.mxu0 0.0
  %418 = vmatpush2.msra.mxu0 0.0
  %419 = vmatprep.subr.mxu0 0.0
  %420 = vmatpush2.msra.mxu0 0.0
  %421 = vmatprep.subr.mxu0 0.0
  %422 = vmatpush2.msra.mxu0 0.0
  %423 = vmatprep.subr.mxu0 0.0
  %424 = vmatpush2.msra.mxu0 0.0
  %425 = vmatprep.subr.mxu0 0.0
  %426 = vmatpush2.msra.mxu0 0.0
  %427 = vmatprep.subr.mxu0 0.0
  %428 = vmatpush2.msra.mxu0 0.0
  %429 = vmatprep.subr.mxu0 0.0
  %430 = vmatpush2.msra.mxu0 0.0
  %431 = vmatprep.subr.mxu0 0.0
  %432 = vmatpush2.msra.mxu0 0.0
  %433 = vmatprep.subr.mxu0 0.0
  %434 = vmatpush2.msra.mxu0 0.0
  %435 = vmatprep.subr.mxu0 0.0
  %436 = vmatpush2.msra.mxu0 0.0
  %437 = vmatprep.subr.mxu0 0.0
  %438 = vmatpush2.msra.mxu0 0.0
  %439 = vmatprep.mubr.f32.mxu0 0.0
  %440 = vmatmul.mubr.f32.gmra.mxu0 %v373
  %v441 = vpop.f32.mrf.mxu0
  %v442 = vadd.f32 0.0, %v441
  %v443 = vpop.f32.mrf.mxu0
  %444 = vdwg.mxu0
  %445 = vadd.xlane.f32.xlu0 %v442
  %v446 = vpop.xlane.xlu0 %445
  %v447 = vmul.f32 %v446, 0.0078125
  %v448 = vmul.f32 %v442, %v442
  %449 = vadd.xlane.f32.xlu0 %v448
  %v450 = vpop.xlane.xlu0 %449
  %v451 = vmul.f32 %v450, 0.0078125
  %v452 = vmul.f32 %v447, %v447
  %v453 = vsub.f32 %v451, %v452
  %v454 = vadd.f32 %v453, 1e-05
  %v455 = vrsqrt.pop %v454
  %v456 = vmul.f32 %v27, %v455
  %v457 = vmul.f32 %v447, %v456
  %459 = vrot.lane.b32.xlu0 %v457, 1
  %v460 = vpop.permute.xlu0 %459
  %v462 = vsub.f32 %v27, %v460
  %464 = vset.pattern.permute.xlu0 0
  %465 = vperm.xlu0 %464, %v456
  %v466 = vpop.permute.xlu0 %465
  %v468 = vmul.f32 %v442, %v466
  %470 = vset.pattern.permute.xlu0 1
  %471 = vperm.xlu0 %470, %v462
  %v472 = vpop.permute.xlu0 %471
  %v474 = vadd.f32 %v468, %v472
  %v475 = vmax.f32 %v474, 0.0
  %v476 = vld [vmem:[%s3] sm:$0xff]
  %v477 = vld [vmem:[%s3 + $0x8] sm:$0xff]
  %vm478 = vcmask 64512
  %v480 = vsel %vm478, %v476, 0
  %v483 = vsel %vm478, %v477, 0
  %485 = vmatprep.subr.mxu0 0.0
  %486 = vmatpush1.msra.mxu0 0.0
  %487 = vmatprep.subr.mxu0 0.0
  %488 = vmatpush1.msra.mxu0 0.0
  %489 = vmatprep.subr.mxu0 0.0
  %490 = vmatpush1.msra.mxu0 0.0
  %491 = vmatprep.subr.mxu0 0.0
  %492 = vmatpush1.msra.mxu0 0.0
  %493 = vmatprep.subr.mxu0 0.0
  %494 = vmatpush1.msra.mxu0 0.0
  %495 = vmatprep.subr.mxu0 0.0
  %496 = vmatpush1.msra.mxu0 0.0
  %497 = vmatprep.subr.mxu0 0.0
  %498 = vmatpush1.msra.mxu0 0.0
  %499 = vmatprep.subr.mxu0 0.0
  %500 = vmatpush1.msra.mxu0 0.0
  %501 = vmatprep.subr.mxu0 0.0
  %502 = vmatpush1.msra.mxu0 0.0
  %503 = vmatprep.subr.mxu0 0.0
  %504 = vmatpush1.msra.mxu0 0.0
  %505 = vmatprep.subr.mxu0 0.0
  %506 = vmatpush1.msra.mxu0 0.0
  %507 = vmatprep.subr.mxu0 0.0
  %508 = vmatpush1.msra.mxu0 0.0
  %509 = vmatprep.subr.mxu0 0.0
  %510 = vmatpush1.msra.mxu0 0.0
  %511 = vmatprep.subr.mxu0 0.0
  %512 = vmatpush1.msra.mxu0 0.0
  %513 = vmatprep.subr.mxu0 0.0
  %514 = vmatpush1.msra.mxu0 0.0
  %515 = vmatprep.subr.mxu0 0.0
  %516 = vmatpush1.msra.mxu0 %v475
  %517 = vmatprep.subr.mxu0 0.0
  %518 = vmatpush2.msra.mxu0 0.0
  %519 = vmatprep.subr.mxu0 0.0
  %520 = vmatpush2.msra.mxu0 0.0
  %521 = vmatprep.subr.mxu0 0.0
  %522 = vmatpush2.msra.mxu0 0.0
  %523 = vmatprep.subr.mxu0 0.0
  %524 = vmatpush2.msra.mxu0 0.0
  %525 = vmatprep.subr.mxu0 0.0
  %526 = vmatpush2.msra.mxu0 0.0
  %527 = vmatprep.subr.mxu0 0.0
  %528 = vmatpush2.msra.mxu0 0.0
  %529 = vmatprep.subr.mxu0 0.0
  %530 = vmatpush2.msra.mxu0 0.0
  %531 = vmatprep.subr.mxu0 0.0
  %532 = vmatpush2.msra.mxu0 0.0
  %533 = vmatprep.subr.mxu0 0.0
  %534 = vmatpush2.msra.mxu0 0.0
  %535 = vmatprep.subr.mxu0 0.0
  %536 = vmatpush2.msra.mxu0 0.0
  %537 = vmatprep.subr.mxu0 0.0
  %538 = vmatpush2.msra.mxu0 0.0
  %539 = vmatprep.subr.mxu0 0.0
  %540 = vmatpush2.msra.mxu0 0.0
  %541 = vmatprep.subr.mxu0 0.0
  %542 = vmatpush2.msra.mxu0 0.0
  %543 = vmatprep.subr.mxu0 0.0
  %544 = vmatpush2.msra.mxu0 0.0
  %545 = vmatprep.subr.mxu0 0.0
  %546 = vmatpush2.msra.mxu0 0.0
  %547 = vmatprep.subr.mxu0 0.0
  %548 = vmatpush2.msra.mxu0 0.0
  %549 = vmatprep.mubr.f32.mxu0 0.0
  %550 = vmatmul.mubr.f32.gmra.mxu0 %v480
  %v551 = vpop.f32.mrf.mxu0
  %v552 = vadd.f32 0.0, %v551
  %v553 = vpop.f32.mrf.mxu0
  %554 = vmatprep.mubr.f32.mxu0 0.0
  %555 = vmatmul.mubr.f32.gmra.mxu0 %v483
  %v556 = vpop.f32.mrf.mxu0
  %v557 = vadd.f32 0.0, %v556
  %v558 = vpop.f32.mrf.mxu0
  %559 = vdwg.mxu0
  %560 = vadd.xlane.f32.xlu0 %v552
  %v561 = vpop.xlane.xlu0 %560
  %562 = vadd.xlane.f32.xlu0 %v557
  %v563 = vpop.xlane.xlu0 %562
  %v564 = vmul.f32 %v561, 0.0078125
  %v565 = vmul.f32 %v563, 0.0078125
  %v566 = vmul.f32 %v552, %v552
  %v567 = vmul.f32 %v557, %v557
  %568 = vadd.xlane.f32.xlu0 %v566
  %v569 = vpop.xlane.xlu0 %568
  %570 = vadd.xlane.f32.xlu0 %v567
  %v571 = vpop.xlane.xlu0 %570
  %v572 = vmul.f32 %v569, 0.0078125
  %v573 = vmul.f32 %v571, 0.0078125
  %v574 = vmul.f32 %v564, %v564
  %v575 = vmul.f32 %v565, %v565
  %v576 = vsub.f32 %v572, %v574
  %v577 = vsub.f32 %v573, %v575
  %v578 = vadd.f32 %v576, 1e-05
  %v579 = vadd.f32 %v577, 1e-05
  %v580 = vrsqrt.pop %v578
  %v581 = vrsqrt.pop %v579
  %v582 = vmul.f32 %v28, %v580
  %v583 = vmul.f32 %v29, %v581
  %v584 = vmul.f32 %v564, %v582
  %v585 = vmul.f32 %v565, %v583
  %588 = vrot.lane.b32.xlu0 %v584, 1
  %v589 = vpop.permute.xlu0 %588
  %590 = vrot.lane.b32.xlu0 %v585, 1
  %v591 = vpop.permute.xlu0 %590
  %v594 = vsub.f32 %v28, %v589
  %v595 = vsub.f32 %v29, %v591
  %597 = vset.pattern.permute.xlu0 0
  %598 = vperm.xlu0 %597, %v582
  %v599 = vpop.permute.xlu0 %598
  %602 = vset.pattern.permute.xlu0 0
  %603 = vperm.xlu0 %602, %v583
  %v604 = vpop.permute.xlu0 %603
  %v606 = vmul.f32 %v552, %v599
  %v607 = vmul.f32 %v557, %v604
  %609 = vset.pattern.permute.xlu0 1
  %610 = vperm.xlu0 %609, %v594
  %v611 = vpop.permute.xlu0 %610
  %614 = vset.pattern.permute.xlu0 1
  %615 = vperm.xlu0 %614, %v595
  %v616 = vpop.permute.xlu0 %615
  %v618 = vadd.f32 %v606, %v611
  %v619 = vadd.f32 %v607, %v616
  %v620 = vadd.f32 %v618, %v215
  %v621 = vadd.f32 %v619, %v216
  %v622 = vmax.f32 %v620, 0.0
  %v623 = vmax.f32 %v621, 0.0
  %624 = vst [vmem:[%s6] sm:$0xff] %v622
  %625 = vst [vmem:[%s6 + $0x8] sm:$0xff] %v623
  // Predicated region
  $region26: #{conv_block.1} parent=0 // pred_check
    _
  $region27: #{conv_block.1} parent=0 // pred_check_branch
    %627 = sbr.rel (0) target = $region29
  $region28: #{conv_block.1} parent=0 // pred_region
    _
  $region29: #{conv_block.1} parent=0 // pred_fallthru
    _
  // Predicated region
  $region30: #{conv_block.1} parent=0 // pred_check
    _
  $region31: #{conv_block.1} parent=0 // pred_check_branch
    %629 = sbr.rel (0) target = $region33
  $region32: #{conv_block.1} parent=0 // pred_region
    _
  $region33: #{conv_block.1} parent=0 // pred_fallthru
    _

</llo_original>
